<compile_context>
chip_gen: v6e
topology: v6e:2x2x1
jax: 0.10.0
libtpu: 0.0.40
codegen_flags: <defaults>
</compile_context>

<pallas_src>
import functools

import jax
import jax.numpy as jnp
from jax.experimental import pallas as pl
from jax.experimental.pallas import tpu as pltpu

_MAX_BLOCK_ELEMS = 2048 * 512   # 4 MiB per f32 input tile


def _cdiv(a, b):
    return -(-a // b)


def _focal_partials_kernel(x_ref, t_ref, out_ref, st_acc, a_acc, b_acc,
                           *, rows, block_rows, soft_targets, ragged):
    # x_ref / t_ref: (block_rows, lane) views of the channel-0 slab / target.
    j = pl.program_id(1)

    @pl.when(j == 0)
    def _():
        st_acc[...] = jnp.zeros_like(st_acc)
        a_acc[...] = jnp.zeros_like(a_acc)
        b_acc[...] = jnp.zeros_like(b_acc)

    x = x_ref[...].astype(jnp.float32)
    t = t_ref[...].astype(jnp.float32)

    if ragged:
        # Last row-block may run past `rows`; edge-block contents are unspecified.
        # Mask x->0, t->0 BEFORE the log: then ll == 0 exactly on both paths
        # (log(1-0)=0 for the binary path; 0*max(log 0,-100)=0 for the soft path),
        # so masked rows contribute nothing to any accumulator.
        valid = rows - j * block_rows
        row_id = jax.lax.broadcasted_iota(jnp.int32, x.shape, 0)
        m = row_id < valid
        x = jnp.where(m, x, 0.0)
        t = jnp.where(m, t, 0.0)

    if soft_targets:
        # Exact torch BCE for arbitrary float targets (two logs).
        log_x = jnp.maximum(jnp.log(x), -100.0)
        log_1mx = jnp.maximum(jnp.log(1.0 - x), -100.0)
        ll = log_1mx + t * (log_x - log_1mx)
        b_term = t * ll
    else:
        # Binary targets (t in {0,1}): identical result with a single log/element.
        t_pos = t > 0.5
        ll = jnp.maximum(jnp.log(jnp.where(t_pos, x, 1.0 - x)), -100.0)
        b_term = jnp.where(t_pos, ll, 0.0)

    # Row-direction partial sums only (VPU adds + tiny sublane reduce);
    # the cross-lane reduce + scalar finalization happen outside the kernel.
    st_acc[...] += jnp.sum(t, axis=0, keepdims=True)        # S_t partial
    a_acc[...] += jnp.sum(ll, axis=0, keepdims=True)        # A partial
    b_acc[...] += jnp.sum(b_term, axis=0, keepdims=True)    # B partial

    @pl.when(j == pl.num_programs(1) - 1)
    def _():
        out_ref[0, 0:1, :] = st_acc[...]
        out_ref[0, 1:2, :] = a_acc[...]
        out_ref[0, 2:3, :] = b_acc[...]


@functools.partial(jax.jit, static_argnames=("gamma", "soft_targets"))
def focal_loss(x, target, gamma=1.0, soft_targets=False):
    """Focal loss forward. `target` may be any dtype (bool/int8/bf16/f32); it is
    cast to f32 in-kernel.  soft_targets=False assumes binary targets (fast path,
    one log/elem); pass soft_targets=True for non-binary float targets."""
    n, c, h, w = x.shape
    assert target.shape == (n, h, w)
    hw = h * w
    total = n * hw

    lane = None
    for cand in (512, 256, 128):
        if hw % cand == 0:
            lane = cand
            break

    if lane is not None:
        # Main path: free reshapes, channel 0 selected via index_map, no extra
        # HBM passes before the kernel.
        rows = hw // lane
        xr = x.reshape(n, c, rows, lane)
        tr = target.reshape(n, rows, lane)       # native dtype, cast in-kernel
        n_eff = n
    else:
        # Rare fallback: H*W not a multiple of 128.
        # TODO(synk): this re-materializes the channel-0 slab (extra HBM pass).
        lane = 128
        x0 = (x if c == 1 else x[:, 0, :, :]).reshape(-1)
        t0 = target.reshape(-1)
        pad = (-total) % lane
        if pad:
            # x=0, t=0 padding contributes exactly 0 to all three sums.
            x0 = jnp.concatenate([x0, jnp.zeros((pad,), x0.dtype)])
            t0 = jnp.concatenate([t0, jnp.zeros((pad,), t0.dtype)])
        rows = (total + pad) // lane
        xr = x0.reshape(1, 1, rows, lane)
        tr = t0.reshape(1, rows, lane)
        n_eff = 1

    max_rows = max(8, _MAX_BLOCK_ELEMS // lane)  # multiple of 8
    if rows <= max_rows:
        block_rows = rows                        # full extent (always legal)
        steps = 1
    else:
        block_rows = max_rows
        steps = _cdiv(rows, block_rows)
    ragged = (rows % block_rows) != 0

    kernel = functools.partial(
        _focal_partials_kernel,
        rows=rows, block_rows=block_rows,
        soft_targets=soft_targets, ragged=ragged)

    partials = pl.pallas_call(
        kernel,
        out_shape=jax.ShapeDtypeStruct((n_eff, 3, lane), jnp.float32),
        grid_spec=pltpu.PrefetchScalarGridSpec(
            num_scalar_prefetch=0,
            grid=(n_eff, steps),
            in_specs=[
                # x: (N, C, rows, lane); squeeze sample+channel dims, pin channel 0.
                pl.BlockSpec((None, None, block_rows, lane),
                             lambda s, j: (s, 0, j, 0)),
                # target: (N, rows, lane); squeeze sample dim.
                pl.BlockSpec((None, block_rows, lane),
                             lambda s, j: (s, j, 0)),
            ],
            out_specs=pl.BlockSpec((1, 3, lane), lambda s, j: (s, 0, 0)),
            scratch_shapes=[
                pltpu.VMEM((1, lane), jnp.float32),
                pltpu.VMEM((1, lane), jnp.float32),
                pltpu.VMEM((1, lane), jnp.float32),
            ],
        ),
        compiler_params=pltpu.CompilerParams(
            dimension_semantics=("parallel", "arbitrary"),
            vmem_limit_bytes=32 * 1024 * 1024),
    )(xr, tr)

    # Scalar finalization on tiny (n_eff, 3, lane) partials, in plain JAX.
    sums = jnp.sum(partials, axis=(0, 2))            # [S_t, A, B]
    n_total = jnp.float32(total)                     # true element count (no pad)
    beta = 1.0 - sums[0] / n_total
    # weights = (1-beta) + (2*beta-1)*t  =>  sum(w*ll) = (1-beta)*A + (2*beta-1)*B
    bce = -((1.0 - beta) * sums[1] + (2.0 * beta - 1.0) * sums[2]) / n_total
    pt = jnp.exp(-bce)
    return (1.0 - pt) ** gamma * bce


def _reference(x, t, gamma=1.0):
    t = t.astype(jnp.float32)
    beta = 1.0 - jnp.mean(t)
    xi = x[:, 0, :, :]
    w = 1.0 - beta + (2.0 * beta - 1.0) * t
    lx = jnp.maximum(jnp.log(xi), -100.0)
    l1 = jnp.maximum(jnp.log(1.0 - xi), -100.0)
    bce = jnp.mean(-w * (t * lx + (1.0 - t) * l1))
    pt = jnp.exp(-bce)
    return jnp.mean((1.0 - pt) ** gamma * bce)


if __name__ == "__main__":
    key = jax.random.PRNGKey(0)
    k1, k2 = jax.random.split(key)
    N, C, H, W = 2, 4, 16, 16

    # BCE requires probabilities in (0, 1); targets are binary.
    x = jax.random.uniform(k1, (N, C, H, W), jnp.float32, 1e-4, 1.0 - 1e-4)
    target = jax.random.bernoulli(k2, 0.3, (N, H, W)).astype(jnp.float32)
    ref = _reference(x, target, gamma=1.0)

    # Main (binary fast-path) run.
    loss = jax.block_until_ready(focal_loss(x, target, gamma=1.0))
    assert jnp.allclose(loss, ref, rtol=1e-4, atol=1e-5), (loss, ref)

    # Exact two-log path (soft-target flag) must also match on binary labels.
    loss_soft = jax.block_until_ready(
        focal_loss(x, target, gamma=1.0, soft_targets=True))
    assert jnp.allclose(loss_soft, ref, rtol=1e-4, atol=1e-5), (loss_soft, ref)

    # Narrow-dtype target (caller contract: no wrapper upcast, cast in-kernel).
    target_bf16 = target.astype(jnp.bfloat16)
    loss_bf16 = jax.block_until_ready(focal_loss(x, target_bf16, gamma=1.0))
    assert jnp.allclose(loss_bf16, ref, rtol=1e-4, atol=1e-5), (loss_bf16, ref)

    print("KERNEL_OK")
</pallas_src>

<mosaic_0001>
module attributes {stable_mosaic.version = 11 : i64} {
  func.func @_focal_partials_kernel(%arg0: i32, %arg1: i32, %arg2: memref<1x1x1x256xf32, #tpu.memory_space<vmem>>, %arg3: memref<1x1x256xf32, #tpu.memory_space<vmem>>, %arg4: memref<1x3x256xf32, #tpu.memory_space<vmem>>, %arg5: memref<1x256xf32, #tpu.memory_space<vmem>>, %arg6: memref<1x256xf32, #tpu.memory_space<vmem>>, %arg7: memref<1x256xf32, #tpu.memory_space<vmem>>) attributes {dimension_semantics = [#tpu.dimension_semantics<parallel>, #tpu.dimension_semantics<arbitrary>], iteration_bounds = array<i64: 2, 1>, scalar_prefetch = 0 : i64, scratch_operands = 3 : i64, tpu.core_type = #tpu.core_type<tc>, window_params = [{transform_indices = @transform_0, window_bounds = array<i64: 1, 1, 1, 256>}, {transform_indices = @transform_1, window_bounds = array<i64: 1, 1, 256>}, {transform_indices = @transform_2, window_bounds = array<i64: 1, 3, 256>}]} {
    %c0_i32 = arith.constant 0 : i32
    %0 = arith.cmpi eq, %arg1, %c0_i32 : i32
    %1 = arith.extui %0 : i1 to i32
    %c0_i32_0 = arith.constant 0 : i32
    %2 = arith.cmpi ne, %1, %c0_i32_0 : i32
    scf.if %2 {
      %cst_27 = arith.constant 0.000000e+00 : f32
      %35 = vector.broadcast %cst_27 : f32 to vector<1x256xf32>
      %c0_28 = arith.constant 0 : index
      %c0_29 = arith.constant 0 : index
      %36 = vector.load %arg5[%c0_28, %c0_29] : memref<1x256xf32, #tpu.memory_space<vmem>>, vector<1x256xf32>
      tpu.vector_store %arg5[%c0_28, %c0_29], %35 {strides = array<i32>} : memref<1x256xf32, #tpu.memory_space<vmem>>, vector<1x256xf32>,
      %cst_30 = arith.constant 0.000000e+00 : f32
      %37 = vector.broadcast %cst_30 : f32 to vector<1x256xf32>
      %c0_31 = arith.constant 0 : index
      %c0_32 = arith.constant 0 : index
      %38 = vector.load %arg6[%c0_31, %c0_32] : memref<1x256xf32, #tpu.memory_space<vmem>>, vector<1x256xf32>
      tpu.vector_store %arg6[%c0_31, %c0_32], %37 {strides = array<i32>} : memref<1x256xf32, #tpu.memory_space<vmem>>, vector<1x256xf32>,
      %cst_33 = arith.constant 0.000000e+00 : f32
      %39 = vector.broadcast %cst_33 : f32 to vector<1x256xf32>
      %c0_34 = arith.constant 0 : index
      %c0_35 = arith.constant 0 : index
      %40 = vector.load %arg7[%c0_34, %c0_35] : memref<1x256xf32, #tpu.memory_space<vmem>>, vector<1x256xf32>
      tpu.vector_store %arg7[%c0_34, %c0_35], %39 {strides = array<i32>} : memref<1x256xf32, #tpu.memory_space<vmem>>, vector<1x256xf32>,
    } else {
    }
    %c0 = arith.constant 0 : index
    %c0_1 = arith.constant 0 : index
    %c0_2 = arith.constant 0 : index
    %c0_3 = arith.constant 0 : index
    %3 = vector.load %arg2[%c0, %c0_1, %c0_2, %c0_3] : memref<1x1x1x256xf32, #tpu.memory_space<vmem>>, vector<1x1x1x256xf32>
    %4 = vector.shape_cast %3 : vector<1x1x1x256xf32> to vector<1x256xf32>
    %c0_4 = arith.constant 0 : index
    %c0_5 = arith.constant 0 : index
    %c0_6 = arith.constant 0 : index
    %5 = vector.load %arg3[%c0_4, %c0_5, %c0_6] : memref<1x1x256xf32, #tpu.memory_space<vmem>>, vector<1x1x256xf32>
    %6 = vector.shape_cast %5 : vector<1x1x256xf32> to vector<1x256xf32>
    %cst = arith.constant 5.000000e-01 : f32
    %7 = vector.broadcast %cst : f32 to vector<1x256xf32>
    %8 = arith.cmpf ogt, %6, %7 : vector<1x256xf32>
    %cst_7 = arith.constant 1.000000e+00 : f32
    %9 = vector.broadcast %cst_7 : f32 to vector<1x256xf32>
    %10 = arith.subf %9, %4 : vector<1x256xf32>
    %11 = arith.select %8, %4, %10 : vector<1x256xi1>, vector<1x256xf32>
    %12 = math.log %11 : vector<1x256xf32>
    %cst_8 = arith.constant -1.000000e+02 : f32
    %13 = vector.broadcast %cst_8 : f32 to vector<1x256xf32>
    %14 = arith.maximumf %12, %13 : vector<1x256xf32>
    %cst_9 = arith.constant 0.000000e+00 : f32
    %15 = vector.broadcast %cst_9 : f32 to vector<1x256xf32>
    %16 = arith.select %8, %14, %15 : vector<1x256xi1>, vector<1x256xf32>
    %c0_10 = arith.constant 0 : index
    %c0_11 = arith.constant 0 : index
    %17 = vector.load %arg5[%c0_10, %c0_11] : memref<1x256xf32, #tpu.memory_space<vmem>>, vector<1x256xf32>
    %cst_12 = arith.constant dense<0.000000e+00> : vector<256xf32>
    %18 = vector.multi_reduction <add>, %6, %cst_12 [0] : vector<1x256xf32> to vector<256xf32>
    %19 = vector.shape_cast %18 : vector<256xf32> to vector<1x256xf32>
    %20 = arith.addf %17, %19 : vector<1x256xf32>
    %c0_13 = arith.constant 0 : index
    %c0_14 = arith.constant 0 : index
    %21 = vector.load %arg5[%c0_13, %c0_14] : memref<1x256xf32, #tpu.memory_space<vmem>>, vector<1x256xf32>
    tpu.vector_store %arg5[%c0_13, %c0_14], %20 {strides = array<i32>} : memref<1x256xf32, #tpu.memory_space<vmem>>, vector<1x256xf32>,
    %c0_15 = arith.constant 0 : index
    %c0_16 = arith.constant 0 : index
    %22 = vector.load %arg6[%c0_15, %c0_16] : memref<1x256xf32, #tpu.memory_space<vmem>>, vector<1x256xf32>
    %cst_17 = arith.constant dense<0.000000e+00> : vector<256xf32>
    %23 = vector.multi_reduction <add>, %14, %cst_17 [0] : vector<1x256xf32> to vector<256xf32>
    %24 = vector.shape_cast %23 : vector<256xf32> to vector<1x256xf32>
    %25 = arith.addf %22, %24 : vector<1x256xf32>
    %c0_18 = arith.constant 0 : index
    %c0_19 = arith.constant 0 : index
    %26 = vector.load %arg6[%c0_18, %c0_19] : memref<1x256xf32, #tpu.memory_space<vmem>>, vector<1x256xf32>
    tpu.vector_store %arg6[%c0_18, %c0_19], %25 {strides = array<i32>} : memref<1x256xf32, #tpu.memory_space<vmem>>, vector<1x256xf32>,
    %c0_20 = arith.constant 0 : index
    %c0_21 = arith.constant 0 : index
    %27 = vector.load %arg7[%c0_20, %c0_21] : memref<1x256xf32, #tpu.memory_space<vmem>>, vector<1x256xf32>
    %cst_22 = arith.constant dense<0.000000e+00> : vector<256xf32>
    %28 = vector.multi_reduction <add>, %16, %cst_22 [0] : vector<1x256xf32> to vector<256xf32>
    %29 = vector.shape_cast %28 : vector<256xf32> to vector<1x256xf32>
    %30 = arith.addf %27, %29 : vector<1x256xf32>
    %c0_23 = arith.constant 0 : index
    %c0_24 = arith.constant 0 : index
    %31 = vector.load %arg7[%c0_23, %c0_24] : memref<1x256xf32, #tpu.memory_space<vmem>>, vector<1x256xf32>
    tpu.vector_store %arg7[%c0_23, %c0_24], %30 {strides = array<i32>} : memref<1x256xf32, #tpu.memory_space<vmem>>, vector<1x256xf32>,
    %c0_i32_25 = arith.constant 0 : i32
    %32 = arith.cmpi eq, %arg1, %c0_i32_25 : i32
    %33 = arith.extui %32 : i1 to i32
    %c0_i32_26 = arith.constant 0 : i32
    %34 = arith.cmpi ne, %33, %c0_i32_26 : i32
    scf.if %34 {
      %c0_27 = arith.constant 0 : index
      %c0_28 = arith.constant 0 : index
      %35 = vector.load %arg5[%c0_27, %c0_28] : memref<1x256xf32, #tpu.memory_space<vmem>>, vector<1x256xf32>
      %c0_29 = arith.constant 0 : index
      %c0_30 = arith.constant 0 : index
      %c0_31 = arith.constant 0 : index
      %36 = vector.load %arg4[%c0_29, %c0_30, %c0_31] : memref<1x3x256xf32, #tpu.memory_space<vmem>>, vector<1x1x256xf32>
      %37 = vector.shape_cast %36 : vector<1x1x256xf32> to vector<1x256xf32>
      %38 = vector.shape_cast %35 : vector<1x256xf32> to vector<1x1x256xf32>
      tpu.vector_store %arg4[%c0_29, %c0_30, %c0_31], %38 {strides = array<i32>} : memref<1x3x256xf32, #tpu.memory_space<vmem>>, vector<1x1x256xf32>,
      %c0_32 = arith.constant 0 : index
      %c0_33 = arith.constant 0 : index
      %39 = vector.load %arg6[%c0_32, %c0_33] : memref<1x256xf32, #tpu.memory_space<vmem>>, vector<1x256xf32>
      %c0_34 = arith.constant 0 : index
      %c1 = arith.constant 1 : index
      %c0_35 = arith.constant 0 : index
      %40 = vector.load %arg4[%c0_34, %c1, %c0_35] : memref<1x3x256xf32, #tpu.memory_space<vmem>>, vector<1x1x256xf32>
      %41 = vector.shape_cast %40 : vector<1x1x256xf32> to vector<1x256xf32>
      %42 = vector.shape_cast %39 : vector<1x256xf32> to vector<1x1x256xf32>
      tpu.vector_store %arg4[%c0_34, %c1, %c0_35], %42 {strides = array<i32>} : memref<1x3x256xf32, #tpu.memory_space<vmem>>, vector<1x1x256xf32>,
      %c0_36 = arith.constant 0 : index
      %c0_37 = arith.constant 0 : index
      %43 = vector.load %arg7[%c0_36, %c0_37] : memref<1x256xf32, #tpu.memory_space<vmem>>, vector<1x256xf32>
      %c0_38 = arith.constant 0 : index
      %c2 = arith.constant 2 : index
      %c0_39 = arith.constant 0 : index
      %44 = vector.load %arg4[%c0_38, %c2, %c0_39] : memref<1x3x256xf32, #tpu.memory_space<vmem>>, vector<1x1x256xf32>
      %45 = vector.shape_cast %44 : vector<1x1x256xf32> to vector<1x256xf32>
      %46 = vector.shape_cast %43 : vector<1x256xf32> to vector<1x1x256xf32>
      tpu.vector_store %arg4[%c0_38, %c2, %c0_39], %46 {strides = array<i32>} : memref<1x3x256xf32, #tpu.memory_space<vmem>>, vector<1x1x256xf32>,
    } else {
    }
    return
  }
  func.func @transform_0(%arg0: i32, %arg1: i32) -> (i32, i32, i32, i32) {
    %c0_i32 = arith.constant 0 : i32
    %c0_i32_0 = arith.constant 0 : i32
    %c0_i32_1 = arith.constant 0 : i32
    return %arg0, %c0_i32, %arg1, %c0_i32_0 : i32, i32, i32, i32
  }
  func.func @transform_1(%arg0: i32, %arg1: i32) -> (i32, i32, i32) {
    %c0_i32 = arith.constant 0 : i32
    %c0_i32_0 = arith.constant 0 : i32
    return %arg0, %arg1, %c0_i32 : i32, i32, i32
  }
  func.func @transform_2(%arg0: i32, %arg1: i32) -> (i32, i32, i32) {
    %c0_i32 = arith.constant 0 : i32
    %c0_i32_0 = arith.constant 0 : i32
    %c0_i32_1 = arith.constant 0 : i32
    return %arg0, %c0_i32, %c0_i32_0 : i32, i32, i32
  }
}

</mosaic_0001>

<llo_original>
// kernel: focal_loss.1
$region0: #{focal_loss.1}
  #allocation0 [shape = 'u32[]', space=smem, size = 0x4, offset = 0x4, fixed_abs, tag = 'smem constant byte address 0x4 - core index']
  #allocation1 [shape = 'u32[144,128]{1,0:T(1,128)}', space=vmem, size = 0x12000, scoped, tag = 'internal scratch']
  #allocation2 [shape = 'f32[1,256]{1,0:T(1,128)}', space=vmem, size = 0x400, scoped, tag = 'scratch operand']
  #allocation3 [shape = 'f32[1,256]{1,0:T(1,128)}', space=vmem, size = 0x400, scoped, tag = 'scratch operand']
  #allocation4 [shape = 'f32[1,256]{1,0:T(1,128)}', space=vmem, size = 0x400, scoped, tag = 'scratch operand']
  %s0 = inlined_call_operand.vmem [shape: f32[2,4,1,256], index: 0, kind: input, shape index: {}]
  %s1 = inlined_call_operand.vmem [shape: f32[2,1,256], index: 1, kind: input, shape index: {}]
  %s2 = inlined_call_operand.vmem [shape: f32[2,3,256], index: 2, kind: output, shape index: {}]
  %s3 = sld [smem:[#allocation0]]
  $region49: #{focal_loss.1} parent=0
    _
  %s5 = ssub.s32 1, %s3
  %s6 = scalar_select 0, %s5, %s3
  loop: start=0, step=1, limit=4
  $region2: #{focal_loss.1} parent=0 // loop_pre_header
    _
  $region3: #{focal_loss.1} parent=0 // loop_header
    %s8 = sphi 0, %s12
    %p9 = scmp.ge.s32.totalorder %s8, 4
    %s15 = sphi 0, %s27
    %s16 = sphi 0, %s23
    %s17 = sphi 0, %s15
    %s18 = sphi 0, %s16
    %s19 = sphi 0, %s17
    %s20 = sphi 0, %s18
    %s32 = sphi 0, %s34
    %s35 = sphi 0, %s32
    %s36 = sphi 0, %s35
    %s52 = sphi 0, %s36
    %s60 = sphi 0, %s62
    %s63 = sphi 0, %s60
    %s64 = sphi 0, %s63
    %s80 = sphi 0, %s64
    %s86 = sphi 0, %s88
    %s89 = sphi 0, %s86
    %s90 = sphi 0, %s89
    %s106 = sphi 0, %s90
  $region4: #{focal_loss.1} parent=0 // loop_header_branch
    %11 = sbr.rel (%p9) target = $region8
  $region5: #{focal_loss.1} parent=0 // loop_body
    %s13 = ssub.s32 %s8, 1
    %s14 = ssub.s32 %s8, 2
    %s21 = sadd.s32 1, %s16
    %p22 = scmp.ge.s32.totalorder %s21, 1
    %s23 = scalar_select %p22, 0, %s21
    %s24 = sadd.s32 1, %s15
    %s25 = scalar_select %p22, %s24, %s15
    %p26 = scmp.ge.s32.totalorder %s25, 2
    %s27 = scalar_select %p26, 0, %s25
    %s28 = ssub.s32 %s15, %s27
    %s29 = ssub.s32 %s16, %s23
    %s30 = sor.u32 %s28, %s29
    %p31 = scmp.eq.s32.totalorder %s30, 0
    %s33 = sadd.s32 %s32, 1
    %s34 = scalar_select %p31, %s32, %s33
    %p37 = pneg %p31
    %p38 = scmp.eq.s32.totalorder %s8, 1
    %p39 = por %p37, %p38
    %p40 = scmp.ne.s32.totalorder %s32, %s35
    %p41 = scmp.eq.s32.totalorder %s8, 0
    %p42 = por %p40, %p41
    %p43 = scmp.ne.s32.totalorder %s32, %s35
    %p44 = scmp.eq.s32.totalorder %s13, 1
    %p45 = por %p43, %p44
    %p46 = scmp.ne.s32.totalorder %s35, %s36
    %p47 = scmp.eq.s32.totalorder %s13, 0
    %p48 = por %p46, %p47
    %p49 = scmp.ne.s32.totalorder %s35, %s36
    %p50 = scmp.eq.s32.totalorder %s14, 1
    %p51 = por %p49, %p50
    %p53 = scmp.ne.s32.totalorder %s36, %s52
    %p54 = scmp.eq.s32.totalorder %s14, 0
    %p55 = por %p53, %p54
    %s56 = ssub.s32 %s15, %s27
    %s57 = ssub.s32 %s16, %s23
    %s58 = sor.u32 %s56, %s57
    %p59 = scmp.eq.s32.totalorder %s58, 0
    %s61 = sadd.s32 %s60, 1
    %s62 = scalar_select %p59, %s60, %s61
    %p65 = pneg %p59
    %p66 = scmp.eq.s32.totalorder %s8, 1
    %p67 = por %p65, %p66
    %p68 = scmp.ne.s32.totalorder %s60, %s63
    %p69 = scmp.eq.s32.totalorder %s8, 0
    %p70 = por %p68, %p69
    %p71 = scmp.ne.s32.totalorder %s60, %s63
    %p72 = scmp.eq.s32.totalorder %s13, 1
    %p73 = por %p71, %p72
    %p74 = scmp.ne.s32.totalorder %s63, %s64
    %p75 = scmp.eq.s32.totalorder %s13, 0
    %p76 = por %p74, %p75
    %p77 = scmp.ne.s32.totalorder %s63, %s64
    %p78 = scmp.eq.s32.totalorder %s14, 1
    %p79 = por %p77, %p78
    %p81 = scmp.ne.s32.totalorder %s64, %s80
    %p82 = scmp.eq.s32.totalorder %s14, 0
    %p83 = por %p81, %p82
    %s84 = ssub.s32 %s15, %s27
    %p85 = scmp.eq.s32.totalorder %s84, 0
    %s87 = sadd.s32 %s86, 1
    %s88 = scalar_select %p85, %s86, %s87
    %p91 = pneg %p85
    %p92 = scmp.eq.s32.totalorder %s8, 1
    %p93 = por %p91, %p92
    %p94 = scmp.ne.s32.totalorder %s86, %s89
    %p95 = scmp.eq.s32.totalorder %s8, 0
    %p96 = por %p94, %p95
    %p97 = scmp.ne.s32.totalorder %s86, %s89
    %p98 = scmp.eq.s32.totalorder %s13, 1
    %p99 = por %p97, %p98
    %p100 = scmp.ne.s32.totalorder %s89, %s90
    %p101 = scmp.eq.s32.totalorder %s13, 0
    %p102 = por %p100, %p101
    %p103 = scmp.ne.s32.totalorder %s89, %s90
    %p104 = scmp.eq.s32.totalorder %s14, 1
    %p105 = por %p103, %p104
    %p107 = scmp.ne.s32.totalorder %s90, %s106
    %p108 = scmp.eq.s32.totalorder %s14, 0
    %p109 = por %p107, %p108
    %p110 = scmp.le.s32.totalorder 1, %s8
    %p111 = scmp.lt.s32.totalorder %s8, 3
    %p112 = pnand %p110, %p111
    %p113 = pneg %p112
    // Predicated region
    $region9: #{focal_loss.1} parent=5 // pred_check
      _
    $region10: #{focal_loss.1} parent=5 // pred_check_branch
      %115 = sbr.rel (%p112) target = $region12
    $region11: #{focal_loss.1} parent=5 // pred_region
      %s116 = ssub.s32 %s8, 1
    $region12: #{focal_loss.1} parent=5 // pred_fallthru
      _
    %p117 = scmp.lt.s32.totalorder %s8, 2
    // Predicated region
    $region13: #{focal_loss.1} parent=5 // pred_check
      %p118 = pneg %p117
    $region14: #{focal_loss.1} parent=5 // pred_check_branch
      %120 = sbr.rel (%p118) target = $region16
    $region15: #{focal_loss.1} parent=5 // pred_region
      // Predicated region
      $region17: #{focal_loss.1} parent=15 // pred_check
        %p121 = pneg %p42
      $region18: #{focal_loss.1} parent=15 // pred_check_branch
        %123 = sbr.rel (%p121) target = $region20
      $region19: #{focal_loss.1} parent=15 // pred_region
        %p124 = scmp.lt.s32.totalorder %s15, 1
        %s125 = scalar_select %p124, %s15, 1
        %p126 = scmp.lt.s32.totalorder %s16, 0
        %s127 = scalar_select %p126, %s16, 0
        %s128 = smul.addr %s127, 2
        %s129 = smul.addr %s125, 8
        %s130 = sadd.s32 %s128, %s129
        %s131 = scalar_lea.vmem %s0, %s130
      $region20: #{focal_loss.1} parent=15 // pred_fallthru
        _
      // Predicated region
      $region21: #{focal_loss.1} parent=15 // pred_check
        %p132 = pneg %p70
      $region22: #{focal_loss.1} parent=15 // pred_check_branch
        %134 = sbr.rel (%p132) target = $region24
      $region23: #{focal_loss.1} parent=15 // pred_region
        %p135 = scmp.lt.s32.totalorder %s15, 1
        %s136 = scalar_select %p135, %s15, 1
        %p137 = scmp.lt.s32.totalorder %s16, 0
        %s138 = scalar_select %p137, %s16, 0
        %s139 = smul.addr %s138, 2
        %s140 = smul.addr %s136, 2
        %s141 = sadd.s32 %s139, %s140
        %s142 = scalar_lea.vmem %s1, %s141
      $region24: #{focal_loss.1} parent=15 // pred_fallthru
        _
    $region16: #{focal_loss.1} parent=5 // pred_fallthru
      _
    %p143 = scmp.le.s32.totalorder 1, %s8
    %p144 = scmp.lt.s32.totalorder %s8, 3
    %p145 = pnand %p143, %p144
    %p146 = pneg %p145
    // Predicated region
    $region25: #{focal_loss.1} parent=5 // pred_check
      _
    $region26: #{focal_loss.1} parent=5 // pred_check_branch
      %148 = sbr.rel (%p145) target = $region28
    $region27: #{focal_loss.1} parent=5 // pred_region
      %s149 = ssub.s32 %s8, 1
      %p150 = scmp.lt.s32.totalorder %s17, 1
      %s151 = scalar_select %p150, %s17, 1
      %p152 = scmp.lt.s32.totalorder %s18, 0
      %s153 = scalar_select %p152, %s18, 0
      %s154 = smul.addr %s153, 2
      %s155 = smul.addr %s151, 8
      %s156 = sadd.s32 %s154, %s155
      %s157 = scalar_lea.vmem %s0, %s156
      %p158 = pneg %p48
      %p159 = pneg %p45
      %p160 = scmp.lt.s32.totalorder %s17, 1
      %s161 = scalar_select %p160, %s17, 1
      %p162 = scmp.lt.s32.totalorder %s18, 0
      %s163 = scalar_select %p162, %s18, 0
      %s164 = smul.addr %s163, 2
      %s165 = smul.addr %s161, 2
      %s166 = sadd.s32 %s164, %s165
      %s167 = scalar_lea.vmem %s1, %s166
      %p168 = pneg %p76
      %p169 = pneg %p73
      %p170 = pneg %p102
      %p171 = pneg %p99
      %p172 = scmp.lt.s32.totalorder %s17, 1
      %s173 = scalar_select %p172, %s17, 1
      %s174 = smul.addr %s173, 2
      %s175 = smul.addr %s174, 4
      %s176 = scalar_lea.vmem %s2, %s175
      %p177 = scmp.lt.s32.totalorder %s17, 1
      %s178 = scalar_select %p177, %s17, 1
      %p179 = scmp.lt.s32.totalorder %s18, 0
      %s180 = scalar_select %p179, %s18, 0
      %s181 = smul.addr %s180, 2
      %s182 = smul.addr %s178, 8
      %s183 = sadd.s32 %s181, %s182
      %s184 = scalar_lea.vmem %s0, %s183
      %p185 = scmp.lt.s32.totalorder %s17, 1
      %s186 = scalar_select %p185, %s17, 1
      %p187 = scmp.lt.s32.totalorder %s18, 0
      %s188 = scalar_select %p187, %s18, 0
      %s189 = smul.addr %s188, 2
      %s190 = smul.addr %s186, 2
      %s191 = sadd.s32 %s189, %s190
      %s192 = scalar_lea.vmem %s1, %s191
      %p193 = scmp.lt.s32.totalorder %s17, 1
      %s194 = scalar_select %p193, %s17, 1
      %s195 = smul.addr %s194, 2
      %s196 = smul.addr %s195, 4
      %s197 = scalar_lea.vmem %s2, %s196
      %p198 = scmp.eq.s32.totalorder %s18, 0
      // Predicated region
      $region29: #{focal_loss.1} parent=27 // pred_check
        %p199 = pneg %p198
      $region30: #{focal_loss.1} parent=27 // pred_check_branch
        %201 = sbr.rel (%p199) target = $region32
      $region31: #{focal_loss.1} parent=27 // pred_region
        %v202 = vlaneseq
        %vm203 = vcmp.ge.s32.totalorder %v202, 0
        %vm204 = vcmp.lt.s32.totalorder %v202, 256
        %vm205 = vmand %vm203, %vm204
        %206 = vst.msk [vmem:[#allocation2] sm:$0x3] %vm205, 0.0
        %207 = vst.msk [vmem:[#allocation3] sm:$0x3] %vm205, 0.0
        %208 = vst.msk [vmem:[#allocation4] sm:$0x3] %vm205, 0.0
      $region32: #{focal_loss.1} parent=27 // pred_fallthru
        _
      %v209 = vld [vmem:[%s184] sm:$0x3]
      %v210 = vld [vmem:[%s192] sm:$0x3]
      %vm211 = vcmp.gt.f32.partialorder %v210, 0.5
      %v212 = vsub.f32 1.0, %v209
      %v213 = vsel %vm211, %v209, %v212
      %v214 = vlog2.pop %v213
      %v215 = vmul.f32 %v214, 0.6931472
      %v216 = vmax.f32 %v215, -100.0
      %v217 = vsel %vm211, %v216, 0.0
      %v218 = vld [vmem:[#allocation2] sm:$0x3]
      %v219 = vadd.f32 %v210, 0.0
      %v220 = vadd.f32 %v218, %v219
      %v221 = vlaneseq
      %vm222 = vcmp.ge.s32.totalorder %v221, 0
      %vm223 = vcmp.lt.s32.totalorder %v221, 256
      %vm224 = vmand %vm222, %vm223
      %225 = vst.msk [vmem:[#allocation2] sm:$0x3] %vm224, %v220
      %v226 = vld [vmem:[#allocation3] sm:$0x3]
      %v227 = vadd.f32 %v216, 0.0
      %v228 = vadd.f32 %v226, %v227
      %229 = vst.msk [vmem:[#allocation3] sm:$0x3] %vm224, %v228
      %v230 = vld [vmem:[#allocation4] sm:$0x3]
      %v231 = vadd.f32 %v217, 0.0
      %v232 = vadd.f32 %v230, %v231
      %233 = vst.msk [vmem:[#allocation4] sm:$0x3] %vm224, %v232
      // Predicated region
      $region33: #{focal_loss.1} parent=27 // pred_check
        %p234 = pneg %p198
      $region34: #{focal_loss.1} parent=27 // pred_check_branch
        %236 = sbr.rel (%p234) target = $region36
      $region35: #{focal_loss.1} parent=27 // pred_region
        %v237 = vld [vmem:[#allocation2] sm:$0x3]
        %238 = vst.msk [vmem:[%s197] ss:$4 sm:$0x3] %vm224, %v237
        %v239 = vld [vmem:[#allocation3] sm:$0x3]
        %s240 = scalar_lea.vmem %s197, 1
        %241 = vst.msk [vmem:[%s240] ss:$4 sm:$0x3] %vm224, %v239
        %v242 = vld [vmem:[#allocation4] sm:$0x3]
        %s243 = scalar_lea.vmem %s197, 2
        %244 = vst.msk [vmem:[%s243] ss:$4 sm:$0x3] %vm224, %v242
      $region36: #{focal_loss.1} parent=27 // pred_fallthru
        _
      %p245 = scmp.lt.s32.totalorder %s17, 1
      %s246 = scalar_select %p245, %s17, 1
      %s247 = smul.addr %s246, 2
      %s248 = smul.addr %s247, 4
      %s249 = scalar_lea.vmem %s2, %s248
      // Predicated region
      $region37: #{focal_loss.1} parent=27 // pred_check
        %p250 = pneg %p99
      $region38: #{focal_loss.1} parent=27 // pred_check_branch
        %252 = sbr.rel (%p250) target = $region40
      $region39: #{focal_loss.1} parent=27 // pred_region
        _
      $region40: #{focal_loss.1} parent=27 // pred_fallthru
        _
    $region28: #{focal_loss.1} parent=5 // pred_fallthru
      _
    %p253 = scmp.le.s32.totalorder 2, %s8
    // Predicated region
    $region41: #{focal_loss.1} parent=5 // pred_check
      %p254 = pneg %p253
    $region42: #{focal_loss.1} parent=5 // pred_check_branch
      %256 = sbr.rel (%p254) target = $region44
    $region43: #{focal_loss.1} parent=5 // pred_region
      %s257 = ssub.s32 %s8, 2
      // Predicated region
      $region45: #{focal_loss.1} parent=43 // pred_check
        %p258 = pneg %p105
      $region46: #{focal_loss.1} parent=43 // pred_check_branch
        %260 = sbr.rel (%p258) target = $region48
      $region47: #{focal_loss.1} parent=43 // pred_region
        %p261 = scmp.lt.s32.totalorder %s19, 1
        %s262 = scalar_select %p261, %s19, 1
        %s263 = smul.addr %s262, 2
        %s264 = smul.addr %s263, 4
        %s265 = scalar_lea.vmem %s2, %s264
      $region48: #{focal_loss.1} parent=43 // pred_fallthru
        _
    $region44: #{focal_loss.1} parent=5 // pred_fallthru
      _
  $region6: #{focal_loss.1} parent=0 // loop_footer
    %s12 = sadd.s32 1, %s8
  $region7: #{focal_loss.1} parent=0 // loop_footer_branch
    %7 = sbr.rel target = $region3
  $region8: #{focal_loss.1} parent=0 // loop_exit
    _

</llo_original>
